<compile_context>
chip_gen: v7x
topology: tpu7x:2x2x1
jax: 0.10.0
libtpu: 0.0.40
codegen_flags: <defaults>
</compile_context>

<pallas_src>
import jax
import jax.numpy as jnp
from jax.experimental import pallas as pl
from jax.experimental.pallas import tpu as pltpu

DT = 0.05
Y_CART = 0.0
VLIM = 20.0

LANE = 128          # TPU lane width
DEFAULT_TILE_B = 8192   # lanes (batch rows) per grid step for large batches

# Deterministic "learnable" dynamics parameters from __init__ (not used by the
# reference forward pass, mirrored here for module-state parity).
POLE_MASS = 1.0
ROB_MASS = 1.0
ANGULAR_DAMPING = 0.1
LINEAR_DAMPING = 0.2


def _cartpole_kernel(s_ref, o_ref):
    # s_ref: (4, TILE_B) f32  rows = [x_rob, x_rob_dot, xmass, ymass]
    # o_ref: (6, TILE_B) f32  rows = [new_x_rob, new_x_rob_dot, new_xmass,
    #                                 new_ymass, new_dot_xmass, new_dot_ymass]
    s = s_ref[...]
    x_rob = s[0:1, :]
    x_rob_dot = s[1:2, :]
    xmass = s[2:3, :]
    ymass = s[3:4, :]

    dx = xmass - x_rob
    dy = Y_CART - ymass
    l = jnp.sqrt(dx * dx + dy * dy)

    # new_theta == x_rob in the reference (it propagates x_rob with zero rate)
    sin_t = jnp.sin(x_rob)
    cos_t = jnp.cos(x_rob)

    new_x_rob = x_rob + x_rob_dot * DT

    o_ref[0:1, :] = new_x_rob
    # clamp(x_rob_dot, min=20, max=20) == 20 for every element
    o_ref[1:2, :] = jnp.full(new_x_rob.shape, VLIM, dtype=o_ref.dtype)
    o_ref[2:3, :] = new_x_rob + l * sin_t
    o_ref[3:4, :] = -l * cos_t
    # new_theta_dot = clamp(0, 20, 20) == 20 is folded into the constant
    o_ref[4:5, :] = l * cos_t * VLIM
    o_ref[5:6, :] = l * sin_t * VLIM


def cartpole_dynamics(state: jax.Array, action: jax.Array,
                      tile_b: int = DEFAULT_TILE_B) -> jax.Array:
    """state: (B, 6) f32, action: (B, 1) f32 (unused) -> next_state (B, 6) f32.

    NOTE: at very small B the pallas_call launch overhead dominates; callers
    with tiny batches should prefer fusing the pure-JAX math into their graph.
    """
    del action  # never used by the reference forward; no DMA generated for it
    B, _ = state.shape
    dtype = state.dtype

    # Only features 0..3 are read -> slice before the transpose (cuts HBM traffic).
    s_t = state[:, :4].T                      # (4, B), batch on lanes

    # Pick a lane tile: multiple of 128, capped at tile_b; pad batch to fit.
    if B <= tile_b:
        tile = max(LANE, pl.cdiv(B, LANE) * LANE)
    else:
        tile = tile_b
    b_pad = pl.cdiv(B, tile) * tile
    if b_pad != B:
        s_t = jnp.pad(s_t, ((0, 0), (0, b_pad - B)))

    out_t = pl.pallas_call(
        _cartpole_kernel,
        out_shape=jax.ShapeDtypeStruct((6, b_pad), dtype),
        grid=(b_pad // tile,),
        in_specs=[pl.BlockSpec((4, tile), lambda i: (0, i))],
        out_specs=pl.BlockSpec((6, tile), lambda i: (0, i)),
        compiler_params=pltpu.CompilerParams(
            dimension_semantics=("parallel",)),
    )(s_t)

    return out_t[:, :B].T                     # back to (B, 6)


def _reference(state, action):
    """Pure-JAX reproduction of the PyTorch forward for verification."""
    del action
    x_rob = state[:, 0:1]
    x_rob_dot = state[:, 1:2]
    xmass = state[:, 2:3]
    ymass = state[:, 3:4]
    dx = xmass - x_rob
    dy = Y_CART - ymass
    l = jnp.sqrt(dx ** 2 + dy ** 2)
    new_x_rob_dot = x_rob_dot
    new_x_rob = x_rob + x_rob_dot * DT
    new_theta = x_rob
    new_sin = jnp.sin(new_theta)
    new_cos = jnp.cos(new_theta)
    new_xmass = new_x_rob + l * new_sin
    new_ymass = -l * new_cos
    new_theta_dot = jnp.float32(VLIM)
    new_x_rob_dot = jnp.full_like(new_x_rob_dot, VLIM)
    new_dot_xmass = l * new_cos * new_theta_dot
    new_dot_ymass = l * new_sin * new_theta_dot
    return jnp.concatenate(
        (new_x_rob, new_x_rob_dot, new_xmass, new_ymass,
         new_dot_xmass, new_dot_ymass),
        axis=1,
    )


if __name__ == "__main__":
    key = jax.random.PRNGKey(0)
    k_state, k_action = jax.random.split(key)
    B = 8
    state = jax.random.normal(k_state, (B, 6), dtype=jnp.float32)
    action = jax.random.normal(k_action, (B, 1), dtype=jnp.float32)

    out = cartpole_dynamics(state, action)
    out = jax.block_until_ready(out)

    ref = _reference(state, action)
    assert out.shape == (B, 6) and out.dtype == jnp.float32
    assert jnp.allclose(out, ref, atol=1e-5, rtol=1e-5), "mismatch vs reference"

    # Also exercise a batch that spans multiple grid steps / padding.
    B2 = 1000
    state2 = jax.random.normal(jax.random.PRNGKey(1), (B2, 6), dtype=jnp.float32)
    action2 = jnp.zeros((B2, 1), dtype=jnp.float32)
    out2 = jax.block_until_ready(cartpole_dynamics(state2, action2, tile_b=256))
    assert jnp.allclose(out2, _reference(state2, action2), atol=1e-5, rtol=1e-5)

    print("KERNEL_OK")
</pallas_src>

<mosaic_0001>
module attributes {stable_mosaic.version = 11 : i64} {
  func.func @_cartpole_kernel(%arg0: i32, %arg1: memref<4x128xf32, #tpu.memory_space<vmem>>, %arg2: memref<6x128xf32, #tpu.memory_space<vmem>>) attributes {dimension_semantics = [#tpu.dimension_semantics<parallel>], iteration_bounds = array<i64: 1>, scalar_prefetch = 0 : i64, scratch_operands = 0 : i64, tpu.core_type = #tpu.core_type<tc>, window_params = [{transform_indices = @transform_0, window_bounds = array<i64: 4, 128>}, {transform_indices = @transform_1, window_bounds = array<i64: 6, 128>}]} {
    %c0 = arith.constant 0 : index
    %c0_0 = arith.constant 0 : index
    %0 = vector.load %arg1[%c0, %c0_0] : memref<4x128xf32, #tpu.memory_space<vmem>>, vector<4x128xf32>
    %1 = vector.extract_strided_slice %0 {offsets = [0, 0], sizes = [1, 128], strides = [1, 1]} : vector<4x128xf32> to vector<1x128xf32>
    %2 = vector.extract_strided_slice %0 {offsets = [1, 0], sizes = [1, 128], strides = [1, 1]} : vector<4x128xf32> to vector<1x128xf32>
    %3 = vector.extract_strided_slice %0 {offsets = [2, 0], sizes = [1, 128], strides = [1, 1]} : vector<4x128xf32> to vector<1x128xf32>
    %4 = vector.extract_strided_slice %0 {offsets = [3, 0], sizes = [1, 128], strides = [1, 1]} : vector<4x128xf32> to vector<1x128xf32>
    %5 = arith.subf %3, %1 : vector<1x128xf32>
    %cst = arith.constant 0.000000e+00 : f32
    %6 = vector.broadcast %cst : f32 to vector<1x128xf32>
    %7 = arith.subf %6, %4 : vector<1x128xf32>
    %8 = arith.mulf %5, %5 : vector<1x128xf32>
    %9 = arith.mulf %7, %7 : vector<1x128xf32>
    %10 = arith.addf %8, %9 : vector<1x128xf32>
    %11 = math.sqrt %10 : vector<1x128xf32>
    %12 = math.sin %1 : vector<1x128xf32>
    %13 = math.cos %1 : vector<1x128xf32>
    %cst_1 = arith.constant 5.000000e-02 : f32
    %14 = vector.broadcast %cst_1 : f32 to vector<1x128xf32>
    %15 = arith.mulf %2, %14 : vector<1x128xf32>
    %16 = arith.addf %1, %15 : vector<1x128xf32>
    %c0_2 = arith.constant 0 : index
    %c0_3 = arith.constant 0 : index
    %17 = vector.load %arg2[%c0_2, %c0_3] : memref<6x128xf32, #tpu.memory_space<vmem>>, vector<1x128xf32>
    tpu.vector_store %arg2[%c0_2, %c0_3], %16 {strides = array<i32>} : memref<6x128xf32, #tpu.memory_space<vmem>>, vector<1x128xf32>,
    %cst_4 = arith.constant 2.000000e+01 : f32
    %18 = vector.broadcast %cst_4 : f32 to vector<1x128xf32>
    %c1 = arith.constant 1 : index
    %c0_5 = arith.constant 0 : index
    %19 = vector.load %arg2[%c1, %c0_5] : memref<6x128xf32, #tpu.memory_space<vmem>>, vector<1x128xf32>
    tpu.vector_store %arg2[%c1, %c0_5], %18 {strides = array<i32>} : memref<6x128xf32, #tpu.memory_space<vmem>>, vector<1x128xf32>,
    %20 = arith.mulf %11, %12 : vector<1x128xf32>
    %21 = arith.addf %16, %20 : vector<1x128xf32>
    %c2 = arith.constant 2 : index
    %c0_6 = arith.constant 0 : index
    %22 = vector.load %arg2[%c2, %c0_6] : memref<6x128xf32, #tpu.memory_space<vmem>>, vector<1x128xf32>
    tpu.vector_store %arg2[%c2, %c0_6], %21 {strides = array<i32>} : memref<6x128xf32, #tpu.memory_space<vmem>>, vector<1x128xf32>,
    %cst_7 = arith.constant 0.000000e+00 : f32
    %23 = vector.broadcast %cst_7 : f32 to vector<1x128xf32>
    %24 = arith.subf %23, %11 : vector<1x128xf32>
    %25 = arith.mulf %24, %13 : vector<1x128xf32>
    %c3 = arith.constant 3 : index
    %c0_8 = arith.constant 0 : index
    %26 = vector.load %arg2[%c3, %c0_8] : memref<6x128xf32, #tpu.memory_space<vmem>>, vector<1x128xf32>
    tpu.vector_store %arg2[%c3, %c0_8], %25 {strides = array<i32>} : memref<6x128xf32, #tpu.memory_space<vmem>>, vector<1x128xf32>,
    %27 = arith.mulf %11, %13 : vector<1x128xf32>
    %cst_9 = arith.constant 2.000000e+01 : f32
    %28 = vector.broadcast %cst_9 : f32 to vector<1x128xf32>
    %29 = arith.mulf %27, %28 : vector<1x128xf32>
    %c4 = arith.constant 4 : index
    %c0_10 = arith.constant 0 : index
    %30 = vector.load %arg2[%c4, %c0_10] : memref<6x128xf32, #tpu.memory_space<vmem>>, vector<1x128xf32>
    tpu.vector_store %arg2[%c4, %c0_10], %29 {strides = array<i32>} : memref<6x128xf32, #tpu.memory_space<vmem>>, vector<1x128xf32>,
    %31 = arith.mulf %11, %12 : vector<1x128xf32>
    %cst_11 = arith.constant 2.000000e+01 : f32
    %32 = vector.broadcast %cst_11 : f32 to vector<1x128xf32>
    %33 = arith.mulf %31, %32 : vector<1x128xf32>
    %c5 = arith.constant 5 : index
    %c0_12 = arith.constant 0 : index
    %34 = vector.load %arg2[%c5, %c0_12] : memref<6x128xf32, #tpu.memory_space<vmem>>, vector<1x128xf32>
    tpu.vector_store %arg2[%c5, %c0_12], %33 {strides = array<i32>} : memref<6x128xf32, #tpu.memory_space<vmem>>, vector<1x128xf32>,
    return
  }
  func.func @transform_0(%arg0: i32) -> (i32, i32) {
    %c0_i32 = arith.constant 0 : i32
    %c0_i32_0 = arith.constant 0 : i32
    return %c0_i32, %arg0 : i32, i32
  }
  func.func @transform_1(%arg0: i32) -> (i32, i32) {
    %c0_i32 = arith.constant 0 : i32
    %c0_i32_0 = arith.constant 0 : i32
    return %c0_i32, %arg0 : i32, i32
  }
}

</mosaic_0001>

<llo_original>
// kernel: tpu_custom_call.1
$region0: #{tpu_custom_call.1}
  #allocation0 [shape = 'u32[]', space=smem, size = 0x4, offset = 0x4, fixed_abs, tag = 'smem constant byte address 0x4 - core index']
  #allocation1 [shape = 'u32[144,128]{1,0:T(1,128)}', space=vmem, size = 0x12000, scoped, tag = 'internal scratch']
  %s0 = inlined_call_operand.hbm [shape: f32[4,128], index: 0, kind: input, shape index: {}]
  %s1 = inlined_call_operand.hbm [shape: f32[6,128], index: 1, kind: output, shape index: {}]
  %s2 = sld [smem:[#allocation0]]
  $region18: #{tpu_custom_call.1} parent=0
    _
  %s4 = ssub.s32 1, %s2
  %s5 = scalar_select 0, %s4, %s2
  $region1: #{tpu_custom_call.1} parent=0
    #allocation2 [shape = 'u8[2048]{0}', space=vmem, size = 0x800, scoped, tag = 'input window, operand 0, single buffered']
    #allocation3 [shape = 's32[1]{0}', space=sflag, size = 0x4, scoped, tag = 'scoped memory for tpu_custom_call.1']
    #allocation4 [shape = 's32[1]{0}', space=sflag, size = 0x4, scoped, tag = 'scoped memory for tpu_custom_call.1']
    #allocation5 [shape = 'u8[4096]{0}', space=vmem, size = 0x1000, scoped, tag = 'output window, operand 0, single buffered']
    %6 = vsyncpa [#allocation3], 0
    %7 = vsyncpa [#allocation4], 0
    // Predicated region
    $region2: #{tpu_custom_call.1} parent=1 // pred_check
      _
    $region3: #{tpu_custom_call.1} parent=1 // pred_check_branch
      %9 = sbr.rel (0) target = $region5
    $region4: #{tpu_custom_call.1} parent=1 // pred_region
      %s11 = ssub.s32 64, 64
      %12 = vsyncadd [#allocation3], %s11
      %s14 = sshll.u32 [#allocation2], 4
      %s15 = int_to_ptr.vmem [resolvable:$true] %s14
      %17 = dma.hbm_to_vmem [thread:$0]  %s0, 64, %s15, [#allocation3]
    $region5: #{tpu_custom_call.1} parent=1 // pred_fallthru
      _
    // Predicated region
    $region6: #{tpu_custom_call.1} parent=1 // pred_check
      _
    $region7: #{tpu_custom_call.1} parent=1 // pred_check_branch
      %19 = sbr.rel (0) target = $region9
    $region8: #{tpu_custom_call.1} parent=1 // pred_region
      %20 = dma.done [#allocation3], 64
    $region9: #{tpu_custom_call.1} parent=1 // pred_fallthru
      _
    %v21 = vld [vmem:[#allocation2] sm:$0xf]
    %v23 = vrot.slane %v21, 6
    %v25 = vsub.f32 %v21, %v23
    %v26 = vsub.f32 0.0, %v21
    %v27 = vmul.f32 %v25, %v25
    %v28 = vmul.f32 %v26, %v26
    %v30 = vrot.slane %v28, 1
    %v32 = vadd.f32 %v27, %v30
    %v33 = vrsqrt.pop %v32
    %v34 = vmul.f32 %v32, %v33
    %vm35 = vcmp.eq.f32.partialorder %v32, inf
    %v36 = vsel %vm35, %v32, %v34
    %vm37 = vcmp.eq.f32.partialorder %v32, 0.0
    %v38 = vand.u32 %v32, 2147483648
    %v39 = vsel %vm37, %v38, %v36
    %v40 = vand.u32 2147483647, %v21
    %vm41 = vcmp.le.f32.partialorder %v40, 0.7853982
    %vm42 = vcmp.lt.s32.totalorder %v21, 0
    %v43 = vand.u32 %v21, 2139095040
    %v44 = vshrl.u32 %v43, 23
    %v45 = vsub.s32 %v44, 127
    %v46 = vand.u32 2147483647, %v21
    %v47 = vand.u32 %v46, 8388607
    %v48 = vor.u32 %v47, 8388608
    %v49 = vsub.s32 0, %v48
    %v50 = vadd.s32 %v45, 1
    %vm51 = vcmp.gt.s32.totalorder %v50, 0
    %v52 = vsel %vm51, %v50, 0
    %v53 = vshrl.u32 %v52, 5
    %v54 = vand.u32 %v52, 31
    %v55 = vsub.s32 32, %v54
    %v56 = vshrl.u32 683565275, %v55
    %v57 = vshll.u32 683565275, %v54
    %v58 = vshrl.u32 2475754826, %v55
    %v59 = vor.u32 %v57, %v58
    %v60 = vshll.u32 2475754826, %v54
    %v61 = vshrl.u32 2131351028, %v55
    %v62 = vor.u32 %v60, %v61
    %v63 = vshll.u32 2131351028, %v54
    %v64 = vshrl.u32 2102212464, %v55
    %v65 = vor.u32 %v63, %v64
    %v66 = vshll.u32 2102212464, %v54
    %v67 = vshrl.u32 920167782, %v55
    %v68 = vor.u32 %v66, %v67
    %v69 = vshll.u32 920167782, %v54
    %v70 = vshrl.u32 1326507024, %v55
    %v71 = vor.u32 %v69, %v70
    %vm72 = vcmp.lt.s32.totalorder %v53, 1
    %vm73 = vcmp.lt.s32.totalorder %v53, 2
    %vm74 = vcmp.lt.s32.totalorder %v53, 3
    %vm75 = vcmp.lt.s32.totalorder %v53, 4
    %v76 = vsel %vm72, %v56, %v59
    %v77 = vsel %vm75, %v65, 2102212464
    %v78 = vsel %vm74, %v62, %v77
    %v79 = vsel %vm73, %v76, %v78
    %v80 = vsel %vm72, %v59, %v62
    %v81 = vsel %vm75, %v68, 920167782
    %v82 = vsel %vm74, %v65, %v81
    %v83 = vsel %vm73, %v80, %v82
    %v84 = vsel %vm72, %v62, %v65
    %v85 = vsel %vm75, %v71, 1326507024
    %v86 = vsel %vm74, %v68, %v85
    %v87 = vsel %vm73, %v84, %v86
    %v88 = vshll.u32 %v48, 8
    %v89 = vmul.u32.u64.compose %v88, %v87
    %v90 = vextract.low.u32 %v89
    %v91 = vextract.high.u32 %v89
    %v92 = vmul.u32.u64.compose %v88, %v83
    %v93 = vextract.low.u32 %v92
    %v94 = vextract.high.u32 %v92
    %v95 = vmul.u32 %v88, %v79
    %v96 = vadd.s32 %v91, %v93
    %vm97 = vc.u32 %v91, %v93
    %v98 = vadd.s32 %v94, 1
    %v99 = vsel %vm97, %v98, %v94
    %v100 = vadd.s32 %v95, %v99
    %v101 = vadd.s32 %v100, 536870912
    %v102 = vshrl.u32 %v101, 30
    %v103 = vshll.u32 %v102, 30
    %v104 = vsub.s32 %v100, %v103
    %vm105 = vcmp.lt.s32.totalorder %v104, 0
    %v106 = vsub.s32 0, %v104
    %v107 = vsel %vm105, %v106, %v104
    %v108 = vclz %v107
    %v109 = vsub.s32 %v108, 2
    %vm110 = vcmp.gt.s32.totalorder 0, %v109
    %v111 = vsel %vm110, 0, %v109
    %v112 = vsub.s32 32, %v111
    %v113 = vshll.u32 %v104, %v111
    %v114 = vshrl.u32 %v96, %v112
    %v115 = vor.u32 %v113, %v114
    %v116 = vsub.s32 4294967266, %v111
    %v117 = vadd.s32 %v116, 127
    %v118 = vshll.u32 %v117, 23
    %v119 = vor.u32 4788187, %v118
    %v120 = vand.u32 2147483647, %v119
    %v122 = vcvt.s32.f32 %v115
    %v123 = vmul.f32 %v122, %v120
    %v124 = vxor.u32 %v123, 2147483648
    %v125 = vsel %vm42, %v124, %v123
    %v126 = vsub.s32 4, %v102
    %v127 = vsel %vm42, %v126, %v102
    %v128 = vsel %vm41, %v21, %v125
    %v129 = vsel %vm41, 0, %v127
    %v130 = vcosq.f32.pop %v128
    %v131 = vsinq.f32.pop %v128
    %vm132 = vweird.f32 %v21
    %v133 = vadd.s32 %v129, 3
    %v134 = vand.u32 %v133, 3
    %vm135 = vcmp.lt.s32.totalorder %v134, 2
    %vm136 = vcmp.eq.s32.totalorder %v134, 0
    %v137 = vxor.u32 %v131, 2147483648
    %v138 = vsel %vm136, %v130, %v137
    %vm139 = vcmp.eq.s32.totalorder %v134, 2
    %v140 = vxor.u32 %v130, 2147483648
    %v141 = vsel %vm139, %v140, %v131
    %v142 = vsel %vm135, %v138, %v141
    %v143 = vsel %vm132, nan, %v142
    %v144 = vand.u32 2147483647, %v21
    %vm145 = vcmp.le.f32.partialorder %v144, 0.7853982
    %vm146 = vcmp.lt.s32.totalorder %v21, 0
    %v147 = vand.u32 %v21, 2139095040
    %v148 = vshrl.u32 %v147, 23
    %v149 = vsub.s32 %v148, 127
    %v150 = vand.u32 2147483647, %v21
    %v151 = vand.u32 %v150, 8388607
    %v152 = vor.u32 %v151, 8388608
    %v153 = vsub.s32 0, %v152
    %v154 = vadd.s32 %v149, 1
    %vm155 = vcmp.gt.s32.totalorder %v154, 0
    %v156 = vsel %vm155, %v154, 0
    %v157 = vshrl.u32 %v156, 5
    %v158 = vand.u32 %v156, 31
    %v159 = vsub.s32 32, %v158
    %v160 = vshrl.u32 683565275, %v159
    %v161 = vshll.u32 683565275, %v158
    %v162 = vshrl.u32 2475754826, %v159
    %v163 = vor.u32 %v161, %v162
    %v164 = vshll.u32 2475754826, %v158
    %v165 = vshrl.u32 2131351028, %v159
    %v166 = vor.u32 %v164, %v165
    %v167 = vshll.u32 2131351028, %v158
    %v168 = vshrl.u32 2102212464, %v159
    %v169 = vor.u32 %v167, %v168
    %v170 = vshll.u32 2102212464, %v158
    %v171 = vshrl.u32 920167782, %v159
    %v172 = vor.u32 %v170, %v171
    %v173 = vshll.u32 920167782, %v158
    %v174 = vshrl.u32 1326507024, %v159
    %v175 = vor.u32 %v173, %v174
    %vm176 = vcmp.lt.s32.totalorder %v157, 1
    %vm177 = vcmp.lt.s32.totalorder %v157, 2
    %vm178 = vcmp.lt.s32.totalorder %v157, 3
    %vm179 = vcmp.lt.s32.totalorder %v157, 4
    %v180 = vsel %vm176, %v160, %v163
    %v181 = vsel %vm179, %v169, 2102212464
    %v182 = vsel %vm178, %v166, %v181
    %v183 = vsel %vm177, %v180, %v182
    %v184 = vsel %vm176, %v163, %v166
    %v185 = vsel %vm179, %v172, 920167782
    %v186 = vsel %vm178, %v169, %v185
    %v187 = vsel %vm177, %v184, %v186
    %v188 = vsel %vm176, %v166, %v169
    %v189 = vsel %vm179, %v175, 1326507024
    %v190 = vsel %vm178, %v172, %v189
    %v191 = vsel %vm177, %v188, %v190
    %v192 = vshll.u32 %v152, 8
    %v193 = vmul.u32.u64.compose %v192, %v191
    %v194 = vextract.low.u32 %v193
    %v195 = vextract.high.u32 %v193
    %v196 = vmul.u32.u64.compose %v192, %v187
    %v197 = vextract.low.u32 %v196
    %v198 = vextract.high.u32 %v196
    %v199 = vmul.u32 %v192, %v183
    %v200 = vadd.s32 %v195, %v197
    %vm201 = vc.u32 %v195, %v197
    %v202 = vadd.s32 %v198, 1
    %v203 = vsel %vm201, %v202, %v198
    %v204 = vadd.s32 %v199, %v203
    %v205 = vadd.s32 %v204, 536870912
    %v206 = vshrl.u32 %v205, 30
    %v207 = vshll.u32 %v206, 30
    %v208 = vsub.s32 %v204, %v207
    %vm209 = vcmp.lt.s32.totalorder %v208, 0
    %v210 = vsub.s32 0, %v208
    %v211 = vsel %vm209, %v210, %v208
    %v212 = vclz %v211
    %v213 = vsub.s32 %v212, 2
    %vm214 = vcmp.gt.s32.totalorder 0, %v213
    %v215 = vsel %vm214, 0, %v213
    %v216 = vsub.s32 32, %v215
    %v217 = vshll.u32 %v208, %v215
    %v218 = vshrl.u32 %v200, %v216
    %v219 = vor.u32 %v217, %v218
    %v220 = vsub.s32 4294967266, %v215
    %v221 = vadd.s32 %v220, 127
    %v222 = vshll.u32 %v221, 23
    %v223 = vor.u32 4788187, %v222
    %v224 = vand.u32 2147483647, %v223
    %v226 = vcvt.s32.f32 %v219
    %v227 = vmul.f32 %v226, %v224
    %v228 = vxor.u32 %v227, 2147483648
    %v229 = vsel %vm146, %v228, %v227
    %v230 = vsub.s32 4, %v206
    %v231 = vsel %vm146, %v230, %v206
    %v232 = vsel %vm145, %v21, %v229
    %v233 = vsel %vm145, 0, %v231
    %v234 = vcosq.f32.pop %v232
    %v235 = vsinq.f32.pop %v232
    %vm236 = vweird.f32 %v21
    %v237 = vand.u32 %v233, 3
    %vm238 = vcmp.lt.s32.totalorder %v237, 2
    %vm239 = vcmp.eq.s32.totalorder %v237, 0
    %v240 = vxor.u32 %v235, 2147483648
    %v241 = vsel %vm239, %v234, %v240
    %vm242 = vcmp.eq.s32.totalorder %v237, 2
    %v243 = vxor.u32 %v234, 2147483648
    %v244 = vsel %vm242, %v243, %v235
    %v245 = vsel %vm238, %v241, %v244
    %v246 = vsel %vm236, nan, %v245
    %v247 = vmul.f32 %v21, 0.05
    %v249 = vrot.slane %v247, 1
    %v251 = vadd.f32 %v21, %v249
    %252 = vst [vmem:[#allocation5] sm:$0x1] %v251
    %253 = vst [vmem:[#allocation5 + $0x1] sm:$0x1] 20.0
    %v255 = vrot.slane %v143, 6
    %v257 = vmul.f32 %v39, %v255
    %v259 = vrot.slane %v257, 2
    %v261 = vadd.f32 %v251, %v259
    %262 = vst [vmem:[#allocation5 + $0x2] sm:$0x1] %v261
    %v263 = vsub.f32 0.0, %v39
    %v265 = vrot.slane %v246, 6
    %v267 = vmul.f32 %v263, %v265
    %268 = vst [vmem:[#allocation5 + $0x1] sm:$0x4] %v267
    %v269 = vmul.f32 %v39, %v265
    %v270 = vmul.f32 %v269, 20.0
    %271 = vst [vmem:[#allocation5 + $0x2] sm:$0x4] %v270
    %v272 = vmul.f32 %v257, 20.0
    %273 = vst [vmem:[#allocation5 + $0x3] sm:$0x4] %v272
    // Predicated region
    $region10: #{tpu_custom_call.1} parent=1 // pred_check
      _
    $region11: #{tpu_custom_call.1} parent=1 // pred_check_branch
      %275 = sbr.rel (0) target = $region13
    $region12: #{tpu_custom_call.1} parent=1 // pred_region
      %s277 = ssub.s32 128, 128
      %278 = vsyncadd [#allocation4], %s277
      %s280 = sshll.u32 [#allocation5], 4
      %s281 = int_to_ptr.vmem [resolvable:$true] %s280
      %283 = dma.vmem_to_hbm [thread:$0]  %s281, 128, %s1, [#allocation4]
    $region13: #{tpu_custom_call.1} parent=1 // pred_fallthru
      _
    // Predicated region
    $region14: #{tpu_custom_call.1} parent=1 // pred_check
      _
    $region15: #{tpu_custom_call.1} parent=1 // pred_check_branch
      %285 = sbr.rel (0) target = $region17
    $region16: #{tpu_custom_call.1} parent=1 // pred_region
      %286 = dma.done [#allocation4], 128
    $region17: #{tpu_custom_call.1} parent=1 // pred_fallthru
      _
    %287 = vsyncpa [#allocation3], 1
    %288 = vsyncpa [#allocation4], 1

</llo_original>
